<compile_context>
chip_gen: v7x
topology: tpu7x:2x2x1
jax: 0.10.0
libtpu: 0.0.40
codegen_flags: <defaults>
</compile_context>

<pallas_src>
import jax
import jax.numpy as jnp
from jax import lax
from jax.experimental import pallas as pl
from jax.experimental.pallas import tpu as pltpu


# Contract the last dim of both operands: A[m, c] x B[n, c] -> [m, n].
_DN_LAST_LAST = (((1,), (1,)), ((), ()))


def _olmo2_mlp_kernel(x_ref, wg_ref, wu_ref, wd_ref, o_ref, acc_ref):
    """One (token-tile, I-tile) grid step.

    x_ref   : [tm, H]   VMEM (same tile for every k)
    wg_ref  : [ti, H]   VMEM  gate rows of W_gate_up (PyTorch [out, in] layout)
    wu_ref  : [ti, H]   VMEM  up   rows of W_gate_up
    wd_ref  : [ti, H]   VMEM  W_down^T rows for this I-tile (contiguous slab)
    o_ref   : [tm, H]   VMEM  output tile (written at the last k)
    acc_ref : [tm, H]   VMEM  f32 accumulator scratch
    """
    k = pl.program_id(1)
    x = x_ref[...]

    # Partial gate / up projections for this I-tile:  [tm, H] . [ti, H]^T -> [tm, ti]
    gate = lax.dot_general(x, wg_ref[...], _DN_LAST_LAST,
                           preferred_element_type=jnp.float32)
    up = lax.dot_general(x, wu_ref[...], _DN_LAST_LAST,
                         preferred_element_type=jnp.float32)

    # SiluAndMul on the [tm, ti] chunk, kept in f32 (EUP sigmoid + VPU muls are
    # hidden under the MXU-bound loop).
    act = gate * jax.nn.sigmoid(gate) * up

    # Down-projection partial:  [tm, ti] . [ti, H] -> [tm, H] (f32 accumulate).
    partial = jnp.dot(act.astype(wd_ref.dtype), wd_ref[...],
                      preferred_element_type=jnp.float32)

    @pl.when(k == 0)
    def _first():
        acc_ref[...] = partial          # direct write: saves a zero + RMW pass

    @pl.when(k != 0)
    def _accum():
        acc_ref[...] += partial

    @pl.when(k == pl.num_programs(1) - 1)
    def _store():
        o_ref[...] = acc_ref[...].astype(o_ref.dtype)


def _round_up(a, b):
    return ((a + b - 1) // b) * b


def _vmem_budget_bytes():
    """Generation-aware VMEM budget (leave headroom for internal scratch)."""
    cap = None
    try:
        info = pltpu.get_tpu_info()
        cap = int(getattr(info, "vmem_capacity_bytes", 0)) or None
    except Exception:
        cap = None
    if cap is None:
        cap = 64 << 20  # conservative fallback (v7x-sized VMEM per TensorCore)
    return int(min(cap * 0.85, 100 << 20))


def _vmem_usage_bytes(tm, ti, H, x_item, w_item):
    """Estimate scoped-VMEM usage for one grid step (double-buffered pipeline)."""
    io = 2 * (2 * tm * H) * x_item        # x + out tiles, double-buffered
    w = 2 * (3 * ti * H) * w_item         # gate/up/down tiles, double-buffered
    acc = tm * H * 4                      # f32 accumulator scratch
    inter = 4 * tm * ti * 4               # gate/up/act(+cast) f32 intermediates
    return io + w + acc + inter + (4 << 20)   # internal compiler scratch headroom


def olmo2_mlp(x, w_gate_up, w_down, *, tm=None, ti=None):
    """Fused Olmo2 MLP.

    x         : [T, H]
    w_gate_up : [2*I, H]   (PyTorch nn.Linear layout; rows [0,I)=gate, [I,2I)=up)
    w_down    : [H, I]     (PyTorch nn.Linear layout)
    returns   : [T, H]
    """
    T, H = x.shape
    two_I, H2 = w_gate_up.shape
    assert H == H2 and two_I % 2 == 0
    I = two_I // 2
    assert w_down.shape == (H, I)

    x_item = jnp.dtype(x.dtype).itemsize
    w_item = jnp.dtype(w_gate_up.dtype).itemsize
    # Sublane-packing granularity: 8 rows (f32) / 16 (bf16) / 32 (int8, fp8).
    sub = 8 * max(1, 4 // x_item)

    budget = _vmem_budget_bytes()

    # --- token tile: the only arithmetic-intensity knob (weights re-streamed
    #     once per token tile).  Large by default; shrunk last. ---
    if tm is None:
        tm = 1024 if budget >= (80 << 20) else 512
    tm = max(sub, _round_up(int(tm), sub))
    tm = min(tm, _round_up(T, sub))

    # --- intermediate (reduction) tile: prefer 512, shrink ti before tm. ---
    if ti is None:
        cands = [c for c in (512, 256, 128) if c <= _round_up(I, 128)]
        if not cands:
            cands = [_round_up(I, 128)]
        ti = None
        while True:
            for c in cands:
                if _vmem_usage_bytes(tm, c, H, x_item, w_item) <= budget:
                    ti = c
                    break
            if ti is not None or tm <= sub:
                break
            tm = max(sub, _round_up(tm // 2, sub))
        if ti is None:
            ti = cands[-1]
    else:
        ti = max(128, _round_up(int(ti), 128))

    I_pad = _round_up(I, ti)
    kg = I_pad // ti
    T_pad = _round_up(T, tm)

    # TODO(synk): in a serving stack, do this split / transpose / pad once at
    # weight-load time instead of per forward call.
    w_gate = w_gate_up[:I]
    w_up = w_gate_up[I:]
    w_down_t = jnp.swapaxes(w_down, 0, 1)          # [I, H]: contiguous (ti, H) tiles
    if I_pad != I:
        pad = ((0, I_pad - I), (0, 0))
        w_gate = jnp.pad(w_gate, pad)
        w_up = jnp.pad(w_up, pad)
        w_down_t = jnp.pad(w_down_t, pad)

    # Ragged T: pad in the wrapper (keeps output stores lane-dense & unmasked).
    xp = x if T_pad == T else jnp.pad(x, ((0, T_pad - T), (0, 0)))

    usage = _vmem_usage_bytes(tm, ti, H, x_item, w_item)
    vmem_limit = int(min(max(usage, 32 << 20), budget))

    grid = (T_pad // tm, kg)

    # TODO(synk): on v7x decode (single token tile) the second TensorCore idles;
    # splitting the I axis across cores with per-core partials would recover it.
    out = pl.pallas_call(
        _olmo2_mlp_kernel,
        out_shape=jax.ShapeDtypeStruct((T_pad, H), x.dtype),
        grid_spec=pltpu.PrefetchScalarGridSpec(
            num_scalar_prefetch=0,
            grid=grid,
            in_specs=[
                pl.BlockSpec((tm, H), lambda i, k: (i, 0)),   # x tile (resident over k)
                pl.BlockSpec((ti, H), lambda i, k: (k, 0)),   # gate rows
                pl.BlockSpec((ti, H), lambda i, k: (k, 0)),   # up rows
                pl.BlockSpec((ti, H), lambda i, k: (k, 0)),   # W_down^T rows (contiguous)
            ],
            out_specs=pl.BlockSpec((tm, H), lambda i, k: (i, 0)),
            scratch_shapes=[pltpu.VMEM((tm, H), jnp.float32)],
        ),
        compiler_params=pltpu.CompilerParams(
            dimension_semantics=("parallel", "arbitrary"),
            vmem_limit_bytes=vmem_limit,
        ),
    )(xp, w_gate, w_up, w_down_t)

    return out if T_pad == T else out[:T]


def olmo2_mlp_reference(x, w_gate_up, w_down):
    gate_up = jnp.dot(x, w_gate_up.T, precision=lax.Precision.HIGHEST)
    I = w_gate_up.shape[0] // 2
    gate, up = gate_up[:, :I], gate_up[:, I:]
    act = jax.nn.silu(gate) * up
    return jnp.dot(act, w_down.T, precision=lax.Precision.HIGHEST)


if __name__ == "__main__":
    # Small synthetic config: tokens=16, hidden=128, intermediate=320.
    # I=320 is deliberately not a multiple of 128*k tiles so the zero-padding
    # path (I_pad=384 at ti=128) is exercised along with the accumulating I
    # axis and the parallel token axis.
    T, H, I = 16, 128, 320
    key = jax.random.PRNGKey(0)
    kx, kgu, kd = jax.random.split(key, 3)

    x = jax.random.normal(kx, (T, H), dtype=jnp.float32)
    # PyTorch nn.Linear-style weight shapes: [out_features, in_features].
    w_gate_up = jax.random.normal(kgu, (2 * I, H), dtype=jnp.float32) * 0.05
    w_down = jax.random.normal(kd, (H, I), dtype=jnp.float32) * 0.05

    ref = olmo2_mlp_reference(x, w_gate_up, w_down)

    # Explicit tiny tiles: grid (2, 3), exercises padding + accumulation.
    out_small = olmo2_mlp(x, w_gate_up, w_down, tm=8, ti=128)
    out_small = jax.block_until_ready(out_small)
    assert out_small.shape == (T, H)
    assert jnp.allclose(out_small, ref, atol=2e-3, rtol=2e-3), "mismatch (explicit tiles)"

    # Auto tile selection (generation-aware VMEM budget).
    out_auto = olmo2_mlp(x, w_gate_up, w_down)
    out_auto = jax.block_until_ready(out_auto)
    assert out_auto.shape == (T, H)
    assert jnp.allclose(out_auto, ref, atol=2e-3, rtol=2e-3), "mismatch (auto tiles)"

    print("KERNEL_OK")
</pallas_src>

<mosaic_0001>
module attributes {stable_mosaic.version = 11 : i64} {
  func.func @_olmo2_mlp_kernel(%arg0: i32, %arg1: i32, %arg2: memref<8x128xf32, #tpu.memory_space<vmem>>, %arg3: memref<128x128xf32, #tpu.memory_space<vmem>>, %arg4: memref<128x128xf32, #tpu.memory_space<vmem>>, %arg5: memref<128x128xf32, #tpu.memory_space<vmem>>, %arg6: memref<8x128xf32, #tpu.memory_space<vmem>>, %arg7: memref<8x128xf32, #tpu.memory_space<vmem>>) attributes {dimension_semantics = [#tpu.dimension_semantics<parallel>, #tpu.dimension_semantics<arbitrary>], iteration_bounds = array<i64: 2, 3>, scalar_prefetch = 0 : i64, scratch_operands = 1 : i64, tpu.core_type = #tpu.core_type<tc>, window_params = [{transform_indices = @transform_0, window_bounds = array<i64: 8, 128>}, {transform_indices = @transform_1, window_bounds = array<i64: 128, 128>}, {transform_indices = @transform_2, window_bounds = array<i64: 128, 128>}, {transform_indices = @transform_3, window_bounds = array<i64: 128, 128>}, {transform_indices = @transform_4, window_bounds = array<i64: 8, 128>}]} {
    %c0 = arith.constant 0 : index
    %c0_0 = arith.constant 0 : index
    %0 = vector.load %arg2[%c0, %c0_0] : memref<8x128xf32, #tpu.memory_space<vmem>>, vector<8x128xf32>
    %c0_1 = arith.constant 0 : index
    %c0_2 = arith.constant 0 : index
    %1 = vector.load %arg3[%c0_1, %c0_2] : memref<128x128xf32, #tpu.memory_space<vmem>>, vector<128x128xf32>
    %cst = arith.constant dense<0.000000e+00> : vector<8x128xf32>
    %2 = tpu.matmul %0, %1, %cst {dimension_numbers = #tpu.dot_dimension_numbers<[1], [1], [0], [0], [0, 0, 1, 0], [], []>} : vector<8x128xf32>, vector<128x128xf32>, vector<8x128xf32> -> vector<8x128xf32>
    %c0_3 = arith.constant 0 : index
    %c0_4 = arith.constant 0 : index
    %3 = vector.load %arg4[%c0_3, %c0_4] : memref<128x128xf32, #tpu.memory_space<vmem>>, vector<128x128xf32>
    %cst_5 = arith.constant dense<0.000000e+00> : vector<8x128xf32>
    %4 = tpu.matmul %0, %3, %cst_5 {dimension_numbers = #tpu.dot_dimension_numbers<[1], [1], [0], [0], [0, 0, 1, 0], [], []>} : vector<8x128xf32>, vector<128x128xf32>, vector<8x128xf32> -> vector<8x128xf32>
    %5 = arith.negf %2 : vector<8x128xf32>
    %6 = math.exp %5 : vector<8x128xf32>
    %cst_6 = arith.constant 1.000000e+00 : f32
    %7 = vector.broadcast %cst_6 : f32 to vector<8x128xf32>
    %8 = arith.addf %7, %6 : vector<8x128xf32>
    %9 = arith.divf %7, %8 : vector<8x128xf32>
    %10 = arith.mulf %2, %9 : vector<8x128xf32>
    %11 = arith.mulf %10, %4 : vector<8x128xf32>
    %c0_7 = arith.constant 0 : index
    %c0_8 = arith.constant 0 : index
    %12 = vector.load %arg5[%c0_7, %c0_8] : memref<128x128xf32, #tpu.memory_space<vmem>>, vector<128x128xf32>
    %cst_9 = arith.constant dense<0.000000e+00> : vector<8x128xf32>
    %13 = tpu.matmul %11, %12, %cst_9 {dimension_numbers = #tpu.dot_dimension_numbers<[1], [0], [0], [1], [0, 0, 1, 1], [], []>} : vector<8x128xf32>, vector<128x128xf32>, vector<8x128xf32> -> vector<8x128xf32>
    %c0_i32 = arith.constant 0 : i32
    %14 = arith.cmpi eq, %arg1, %c0_i32 : i32
    %15 = arith.extui %14 : i1 to i32
    %c0_i32_10 = arith.constant 0 : i32
    %16 = arith.cmpi ne, %15, %c0_i32_10 : i32
    scf.if %16 {
      %c0_14 = arith.constant 0 : index
      %c0_15 = arith.constant 0 : index
      %23 = vector.load %arg7[%c0_14, %c0_15] : memref<8x128xf32, #tpu.memory_space<vmem>>, vector<8x128xf32>
      tpu.vector_store %arg7[%c0_14, %c0_15], %13 {strides = array<i32>} : memref<8x128xf32, #tpu.memory_space<vmem>>, vector<8x128xf32>,
    } else {
    }
    %c0_i32_11 = arith.constant 0 : i32
    %17 = arith.cmpi ne, %arg1, %c0_i32_11 : i32
    %18 = arith.extui %17 : i1 to i32
    %c0_i32_12 = arith.constant 0 : i32
    %19 = arith.cmpi ne, %18, %c0_i32_12 : i32
    scf.if %19 {
      %c0_14 = arith.constant 0 : index
      %c0_15 = arith.constant 0 : index
      %23 = vector.load %arg7[%c0_14, %c0_15] : memref<8x128xf32, #tpu.memory_space<vmem>>, vector<8x128xf32>
      %24 = arith.addf %23, %13 : vector<8x128xf32>
      %c0_16 = arith.constant 0 : index
      %c0_17 = arith.constant 0 : index
      %25 = vector.load %arg7[%c0_16, %c0_17] : memref<8x128xf32, #tpu.memory_space<vmem>>, vector<8x128xf32>
      tpu.vector_store %arg7[%c0_16, %c0_17], %24 {strides = array<i32>} : memref<8x128xf32, #tpu.memory_space<vmem>>, vector<8x128xf32>,
    } else {
    }
    %c2_i32 = arith.constant 2 : i32
    %20 = arith.cmpi eq, %arg1, %c2_i32 : i32
    %21 = arith.extui %20 : i1 to i32
    %c0_i32_13 = arith.constant 0 : i32
    %22 = arith.cmpi ne, %21, %c0_i32_13 : i32
    scf.if %22 {
      %c0_14 = arith.constant 0 : index
      %c0_15 = arith.constant 0 : index
      %23 = vector.load %arg7[%c0_14, %c0_15] : memref<8x128xf32, #tpu.memory_space<vmem>>, vector<8x128xf32>
      %c0_16 = arith.constant 0 : index
      %c0_17 = arith.constant 0 : index
      %24 = vector.load %arg6[%c0_16, %c0_17] : memref<8x128xf32, #tpu.memory_space<vmem>>, vector<8x128xf32>
      tpu.vector_store %arg6[%c0_16, %c0_17], %23 {strides = array<i32>} : memref<8x128xf32, #tpu.memory_space<vmem>>, vector<8x128xf32>,
    } else {
    }
    return
  }
  func.func @transform_0(%arg0: i32, %arg1: i32) -> (i32, i32) {
    %c0_i32 = arith.constant 0 : i32
    %c0_i32_0 = arith.constant 0 : i32
    return %arg0, %c0_i32 : i32, i32
  }
  func.func @transform_1(%arg0: i32, %arg1: i32) -> (i32, i32) {
    %c0_i32 = arith.constant 0 : i32
    %c0_i32_0 = arith.constant 0 : i32
    return %arg1, %c0_i32 : i32, i32
  }
  func.func @transform_2(%arg0: i32, %arg1: i32) -> (i32, i32) {
    %c0_i32 = arith.constant 0 : i32
    %c0_i32_0 = arith.constant 0 : i32
    return %arg1, %c0_i32 : i32, i32
  }
  func.func @transform_3(%arg0: i32, %arg1: i32) -> (i32, i32) {
    %c0_i32 = arith.constant 0 : i32
    %c0_i32_0 = arith.constant 0 : i32
    return %arg1, %c0_i32 : i32, i32
  }
  func.func @transform_4(%arg0: i32, %arg1: i32) -> (i32, i32) {
    %c0_i32 = arith.constant 0 : i32
    %c0_i32_0 = arith.constant 0 : i32
    return %arg0, %c0_i32 : i32, i32
  }
}

</mosaic_0001>

<llo_original>
// kernel: tpu_custom_call.1
$region0: #{tpu_custom_call.1}
  #allocation0 [shape = 'u32[]', space=smem, size = 0x4, offset = 0x4, fixed_abs, tag = 'smem constant byte address 0x4 - core index']
  #allocation1 [shape = 'u32[144,128]{1,0:T(1,128)}', space=vmem, size = 0x12000, scoped, tag = 'internal scratch']
  #allocation2 [shape = 'f32[8,128]{1,0:T(8,128)}', space=vmem, size = 0x1000, scoped, tag = 'scratch operand']
  %s0 = inlined_call_operand.hbm [shape: f32[16,128], index: 0, kind: input, shape index: {}]
  %s1 = inlined_call_operand.hbm [shape: f32[384,128], index: 1, kind: input, shape index: {}]
  %s2 = inlined_call_operand.hbm [shape: f32[384,128], index: 2, kind: input, shape index: {}]
  %s3 = inlined_call_operand.hbm [shape: f32[384,128], index: 3, kind: input, shape index: {}]
  %s4 = inlined_call_operand.hbm [shape: f32[16,128], index: 4, kind: output, shape index: {}]
  %s5 = sld [smem:[#allocation0]]
  $region77: #{tpu_custom_call.1} parent=0
    _
  %s7 = ssub.s32 1, %s5
  %s8 = scalar_select 0, %s7, %s5
  $region1: #{tpu_custom_call.1} parent=0
    #allocation3 [shape = 'u8[8192]{0}', space=vmem, size = 0x2000, scoped, tag = 'input window, operand 0']
    #allocation4 [shape = 's32[2]{0}', space=sflag, size = 0x8, scoped, tag = 'scoped memory for tpu_custom_call.1']
    #allocation5 [shape = 's32[2]{0}', space=sflag, size = 0x8, scoped, tag = 'scoped memory for tpu_custom_call.1']
    #allocation6 [shape = 'u8[131072]{0}', space=vmem, size = 0x20000, scoped, tag = 'input window, operand 1']
    #allocation7 [shape = 's32[2]{0}', space=sflag, size = 0x8, scoped, tag = 'scoped memory for tpu_custom_call.1']
    #allocation8 [shape = 'u8[131072]{0}', space=vmem, size = 0x20000, scoped, tag = 'input window, operand 2']
    #allocation9 [shape = 'u8[131072]{0}', space=vmem, size = 0x20000, scoped, tag = 'input window, operand 3']
    #allocation10 [shape = 's32[2]{0}', space=sflag, size = 0x8, scoped, tag = 'scoped memory for tpu_custom_call.1']
    #allocation11 [shape = 'u8[8192]{0}', space=vmem, size = 0x2000, scoped, tag = 'output window, operand 0']
    %9 = vsyncpa [#allocation4], 0
    %s10 = scalar_lea.sflag [#allocation4], 1
    %11 = vsyncpa %s10, 0
    %12 = vsyncpa [#allocation7], 0
    %s13 = scalar_lea.sflag [#allocation7], 1
    %14 = vsyncpa %s13, 0
    %15 = vsyncpa [#allocation10], 0
    %s16 = scalar_lea.sflag [#allocation10], 1
    %17 = vsyncpa %s16, 0
    %18 = vsyncpa [#allocation5], 0
    %s19 = scalar_lea.sflag [#allocation5], 1
    %20 = vsyncpa %s19, 0
    loop: start=0, step=1, limit=8
    $region2: #{tpu_custom_call.1} parent=1 // loop_pre_header
      _
    $region3: #{tpu_custom_call.1} parent=1 // loop_header
      %s22 = sphi 0, %s26
      %p23 = scmp.ge.s32.totalorder %s22, 8
      %s29 = sphi 0, %s41
      %s30 = sphi 0, %s37
      %s31 = sphi 0, %s29
      %s32 = sphi 0, %s30
      %s33 = sphi 0, %s31
      %s34 = sphi 0, %s32
      %s44 = sphi 0, %s46
      %s47 = sphi 0, %s44
      %s48 = sphi 0, %s47
      %s64 = sphi 0, %s48
      %s70 = sphi 0, %s72
      %s73 = sphi 0, %s70
      %s74 = sphi 0, %s73
      %s90 = sphi 0, %s74
      %s96 = sphi 0, %s98
      %s99 = sphi 0, %s96
      %s100 = sphi 0, %s99
      %s116 = sphi 0, %s100
      %s122 = sphi 0, %s124
      %s125 = sphi 0, %s122
      %s126 = sphi 0, %s125
      %s142 = sphi 0, %s126
      %s148 = sphi 0, %s150
      %s151 = sphi 0, %s148
      %s152 = sphi 0, %s151
      %s168 = sphi 0, %s152
    $region4: #{tpu_custom_call.1} parent=1 // loop_header_branch
      %25 = sbr.rel (%p23) target = $region8
    $region5: #{tpu_custom_call.1} parent=1 // loop_body
      %s27 = ssub.s32 %s22, 1
      %s28 = ssub.s32 %s22, 2
      %s35 = sadd.s32 1, %s30
      %p36 = scmp.ge.s32.totalorder %s35, 3
      %s37 = scalar_select %p36, 0, %s35
      %s38 = sadd.s32 1, %s29
      %s39 = scalar_select %p36, %s38, %s29
      %p40 = scmp.ge.s32.totalorder %s39, 2
      %s41 = scalar_select %p40, 0, %s39
      %s42 = ssub.s32 %s29, %s41
      %p43 = scmp.eq.s32.totalorder %s42, 0
      %s45 = sadd.s32 %s44, 1
      %s46 = scalar_select %p43, %s44, %s45
      %p49 = pneg %p43
      %p50 = scmp.eq.s32.totalorder %s22, 5
      %p51 = por %p49, %p50
      %p52 = scmp.ne.s32.totalorder %s44, %s47
      %p53 = scmp.eq.s32.totalorder %s22, 0
      %p54 = por %p52, %p53
      %p55 = scmp.ne.s32.totalorder %s44, %s47
      %p56 = scmp.eq.s32.totalorder %s27, 5
      %p57 = por %p55, %p56
      %p58 = scmp.ne.s32.totalorder %s47, %s48
      %p59 = scmp.eq.s32.totalorder %s27, 0
      %p60 = por %p58, %p59
      %p61 = scmp.ne.s32.totalorder %s47, %s48
      %p62 = scmp.eq.s32.totalorder %s28, 5
      %p63 = por %p61, %p62
      %p65 = scmp.ne.s32.totalorder %s48, %s64
      %p66 = scmp.eq.s32.totalorder %s28, 0
      %p67 = por %p65, %p66
      %s68 = ssub.s32 %s30, %s37
      %p69 = scmp.eq.s32.totalorder %s68, 0
      %s71 = sadd.s32 %s70, 1
      %s72 = scalar_select %p69, %s70, %s71
      %p75 = pneg %p69
      %p76 = scmp.eq.s32.totalorder %s22, 5
      %p77 = por %p75, %p76
      %p78 = scmp.ne.s32.totalorder %s70, %s73
      %p79 = scmp.eq.s32.totalorder %s22, 0
      %p80 = por %p78, %p79
      %p81 = scmp.ne.s32.totalorder %s70, %s73
      %p82 = scmp.eq.s32.totalorder %s27, 5
      %p83 = por %p81, %p82
      %p84 = scmp.ne.s32.totalorder %s73, %s74
      %p85 = scmp.eq.s32.totalorder %s27, 0
      %p86 = por %p84, %p85
      %p87 = scmp.ne.s32.totalorder %s73, %s74
      %p88 = scmp.eq.s32.totalorder %s28, 5
      %p89 = por %p87, %p88
      %p91 = scmp.ne.s32.totalorder %s74, %s90
      %p92 = scmp.eq.s32.totalorder %s28, 0
      %p93 = por %p91, %p92
      %s94 = ssub.s32 %s30, %s37
      %p95 = scmp.eq.s32.totalorder %s94, 0
      %s97 = sadd.s32 %s96, 1
      %s98 = scalar_select %p95, %s96, %s97
      %p101 = pneg %p95
      %p102 = scmp.eq.s32.totalorder %s22, 5
      %p103 = por %p101, %p102
      %p104 = scmp.ne.s32.totalorder %s96, %s99
      %p105 = scmp.eq.s32.totalorder %s22, 0
      %p106 = por %p104, %p105
      %p107 = scmp.ne.s32.totalorder %s96, %s99
      %p108 = scmp.eq.s32.totalorder %s27, 5
      %p109 = por %p107, %p108
      %p110 = scmp.ne.s32.totalorder %s99, %s100
      %p111 = scmp.eq.s32.totalorder %s27, 0
      %p112 = por %p110, %p111
      %p113 = scmp.ne.s32.totalorder %s99, %s100
      %p114 = scmp.eq.s32.totalorder %s28, 5
      %p115 = por %p113, %p114
      %p117 = scmp.ne.s32.totalorder %s100, %s116
      %p118 = scmp.eq.s32.totalorder %s28, 0
      %p119 = por %p117, %p118
      %s120 = ssub.s32 %s30, %s37
      %p121 = scmp.eq.s32.totalorder %s120, 0
      %s123 = sadd.s32 %s122, 1
      %s124 = scalar_select %p121, %s122, %s123
      %p127 = pneg %p121
      %p128 = scmp.eq.s32.totalorder %s22, 5
      %p129 = por %p127, %p128
      %p130 = scmp.ne.s32.totalorder %s122, %s125
      %p131 = scmp.eq.s32.totalorder %s22, 0
      %p132 = por %p130, %p131
      %p133 = scmp.ne.s32.totalorder %s122, %s125
      %p134 = scmp.eq.s32.totalorder %s27, 5
      %p135 = por %p133, %p134
      %p136 = scmp.ne.s32.totalorder %s125, %s126
      %p137 = scmp.eq.s32.totalorder %s27, 0
      %p138 = por %p136, %p137
      %p139 = scmp.ne.s32.totalorder %s125, %s126
      %p140 = scmp.eq.s32.totalorder %s28, 5
      %p141 = por %p139, %p140
      %p143 = scmp.ne.s32.totalorder %s126, %s142
      %p144 = scmp.eq.s32.totalorder %s28, 0
      %p145 = por %p143, %p144
      %s146 = ssub.s32 %s29, %s41
      %p147 = scmp.eq.s32.totalorder %s146, 0
      %s149 = sadd.s32 %s148, 1
      %s150 = scalar_select %p147, %s148, %s149
      %p153 = pneg %p147
      %p154 = scmp.eq.s32.totalorder %s22, 5
      %p155 = por %p153, %p154
      %p156 = scmp.ne.s32.totalorder %s148, %s151
      %p157 = scmp.eq.s32.totalorder %s22, 0
      %p158 = por %p156, %p157
      %p159 = scmp.ne.s32.totalorder %s148, %s151
      %p160 = scmp.eq.s32.totalorder %s27, 5
      %p161 = por %p159, %p160
      %p162 = scmp.ne.s32.totalorder %s151, %s152
      %p163 = scmp.eq.s32.totalorder %s27, 0
      %p164 = por %p162, %p163
      %p165 = scmp.ne.s32.totalorder %s151, %s152
      %p166 = scmp.eq.s32.totalorder %s28, 5
      %p167 = por %p165, %p166
      %p169 = scmp.ne.s32.totalorder %s152, %s168
      %p170 = scmp.eq.s32.totalorder %s28, 0
      %p171 = por %p169, %p170
      %p172 = scmp.le.s32.totalorder 1, %s22
      %p173 = scmp.lt.s32.totalorder %s22, 7
      %p174 = pnand %p172, %p173
      %p175 = pneg %p174
      // Predicated region
      $region9: #{tpu_custom_call.1} parent=5 // pred_check
        _
      $region10: #{tpu_custom_call.1} parent=5 // pred_check_branch
        %177 = sbr.rel (%p174) target = $region12
      $region11: #{tpu_custom_call.1} parent=5 // pred_region
        %s178 = ssub.s32 %s22, 1
      $region12: #{tpu_custom_call.1} parent=5 // pred_fallthru
        _
      %p179 = scmp.lt.s32.totalorder %s22, 6
      // Predicated region
      $region13: #{tpu_custom_call.1} parent=5 // pred_check
        %p180 = pneg %p179
      $region14: #{tpu_custom_call.1} parent=5 // pred_check_branch
        %182 = sbr.rel (%p180) target = $region16
      $region15: #{tpu_custom_call.1} parent=5 // pred_region
        // Predicated region
        $region17: #{tpu_custom_call.1} parent=15 // pred_check
          %p183 = pneg %p54
        $region18: #{tpu_custom_call.1} parent=15 // pred_check_branch
          %185 = sbr.rel (%p183) target = $region20
        $region19: #{tpu_custom_call.1} parent=15 // pred_region
          %s186 = sand.u32 %s44, 1
          %s187 = scalar_lea.sflag [#allocation4], %s186
          %s188 = sand.u32 %s44, 1
          %s189 = smul.addr %s188, 8
          %s190 = scalar_lea.vmem [#allocation3], %s189
          %s192 = ssub.s32 128, 128
          %193 = vsyncadd %s187, %s192
          %s194 = smul.addr %s29, 128
          %s195 = scalar_lea.hbm %s0, %s194
          %s197 = sshll.u32 %s190, 4
          %s198 = int_to_ptr.vmem [resolvable:$true] %s197
          %200 = dma.hbm_to_vmem [thread:$0]  %s195, 128, %s198, %s187
        $region20: #{tpu_custom_call.1} parent=15 // pred_fallthru
          _
        // Predicated region
        $region21: #{tpu_custom_call.1} parent=15 // pred_check
          %p201 = pneg %p80
        $region22: #{tpu_custom_call.1} parent=15 // pred_check_branch
          %203 = sbr.rel (%p201) target = $region24
        $region23: #{tpu_custom_call.1} parent=15 // pred_region
          %s204 = sand.u32 %s22, 1
          %s205 = scalar_lea.sflag [#allocation7], %s204
          %s206 = sand.u32 %s70, 1
          %s207 = smul.addr %s206, 128
          %s208 = scalar_lea.vmem [#allocation6], %s207
          %s209 = smul.u32 16, %s30
          %s211 = ssub.s32 2048, 2048
          %212 = vsyncadd %s205, %s211
          %s213 = smul.addr %s209, 128
          %s214 = scalar_lea.hbm %s1, %s213
          %s215 = sshll.u32 %s208, 4
          %s216 = int_to_ptr.vmem [resolvable:$true] %s215
          %221 = dma.hbm_to_vmem [thread:$0]  %s214, 2048, %s216, %s205, 128, 128, 8
        $region24: #{tpu_custom_call.1} parent=15 // pred_fallthru
          _
        // Predicated region
        $region25: #{tpu_custom_call.1} parent=15 // pred_check
          %p222 = pneg %p106
        $region26: #{tpu_custom_call.1} parent=15 // pred_check_branch
          %224 = sbr.rel (%p222) target = $region28
        $region27: #{tpu_custom_call.1} parent=15 // pred_region
          %s225 = sand.u32 %s22, 1
          %s226 = scalar_lea.sflag [#allocation7], %s225
          %s227 = sand.u32 %s96, 1
          %s228 = smul.addr %s227, 128
          %s229 = scalar_lea.vmem [#allocation8], %s228
          %s230 = smul.u32 16, %s30
          %s232 = ssub.s32 2048, 2048
          %233 = vsyncadd %s226, %s232
          %s234 = smul.addr %s230, 128
          %s235 = scalar_lea.hbm %s2, %s234
          %s236 = sshll.u32 %s229, 4
          %s237 = int_to_ptr.vmem [resolvable:$true] %s236
          %242 = dma.hbm_to_vmem [thread:$0]  %s235, 2048, %s237, %s226, 128, 128, 8
        $region28: #{tpu_custom_call.1} parent=15 // pred_fallthru
          _
        // Predicated region
        $region29: #{tpu_custom_call.1} parent=15 // pred_check
          %p243 = pneg %p132
        $region30: #{tpu_custom_call.1} parent=15 // pred_check_branch
          %245 = sbr.rel (%p243) target = $region32
        $region31: #{tpu_custom_call.1} parent=15 // pred_region
          %s246 = sand.u32 %s122, 1
          %s247 = scalar_lea.sflag [#allocation10], %s246
          %s248 = sand.u32 %s122, 1
          %s249 = smul.addr %s248, 128
          %s250 = scalar_lea.vmem [#allocation9], %s249
          %s251 = smul.u32 16, %s30
          %s253 = ssub.s32 2048, 2048
          %254 = vsyncadd %s247, %s253
          %s255 = smul.addr %s251, 128
          %s256 = scalar_lea.hbm %s3, %s255
          %s257 = sshll.u32 %s250, 4
          %s258 = int_to_ptr.vmem [resolvable:$true] %s257
          %263 = dma.hbm_to_vmem [thread:$0]  %s256, 2048, %s258, %s247, 128, 128, 8
        $region32: #{tpu_custom_call.1} parent=15 // pred_fallthru
          _
      $region16: #{tpu_custom_call.1} parent=5 // pred_fallthru
        _
      %p264 = scmp.le.s32.totalorder 1, %s22
      %p265 = scmp.lt.s32.totalorder %s22, 7
      %p266 = pnand %p264, %p265
      %p267 = pneg %p266
      // Predicated region
      $region33: #{tpu_custom_call.1} parent=5 // pred_check
        _
      $region34: #{tpu_custom_call.1} parent=5 // pred_check_branch
        %269 = sbr.rel (%p266) target = $region36
      $region35: #{tpu_custom_call.1} parent=5 // pred_region
        %s270 = ssub.s32 %s22, 1
        %s271 = sand.u32 %s47, 1
        %s272 = scalar_lea.sflag [#allocation4], %s271
        %s273 = sand.u32 %s47, 1
        %s274 = smul.addr %s273, 8
        %s275 = scalar_lea.vmem [#allocation3], %s274
        // Predicated region
        $region37: #{tpu_custom_call.1} parent=35 // pred_check
          %p276 = pneg %p60
        $region38: #{tpu_custom_call.1} parent=35 // pred_check_branch
          %278 = sbr.rel (%p276) target = $region40
        $region39: #{tpu_custom_call.1} parent=35 // pred_region
          %279 = dma.done %s272, 128
        $region40: #{tpu_custom_call.1} parent=35 // pred_fallthru
          _
        %s280 = sand.u32 %s27, 1
        %s281 = scalar_lea.sflag [#allocation7], %s280
        %s282 = sand.u32 %s73, 1
        %s283 = smul.addr %s282, 128
        %s284 = scalar_lea.vmem [#allocation6], %s283
        // Predicated region
        $region41: #{tpu_custom_call.1} parent=35 // pred_check
          %p285 = pneg %p86
        $region42: #{tpu_custom_call.1} parent=35 // pred_check_branch
          %287 = sbr.rel (%p285) target = $region44
        $region43: #{tpu_custom_call.1} parent=35 // pred_region
          %288 = dma.done %s281, 2048
        $region44: #{tpu_custom_call.1} parent=35 // pred_fallthru
          _
        %s289 = sand.u32 %s27, 1
        %s290 = scalar_lea.sflag [#allocation7], %s289
        %s291 = sand.u32 %s99, 1
        %s292 = smul.addr %s291, 128
        %s293 = scalar_lea.vmem [#allocation8], %s292
        // Predicated region
        $region45: #{tpu_custom_call.1} parent=35 // pred_check
          %p294 = pneg %p112
        $region46: #{tpu_custom_call.1} parent=35 // pred_check_branch
          %296 = sbr.rel (%p294) target = $region48
        $region47: #{tpu_custom_call.1} parent=35 // pred_region
          %297 = dma.done %s290, 2048
        $region48: #{tpu_custom_call.1} parent=35 // pred_fallthru
          _
        %s298 = sand.u32 %s125, 1
        %s299 = scalar_lea.sflag [#allocation10], %s298
        %s300 = sand.u32 %s125, 1
        %s301 = smul.addr %s300, 128
        %s302 = scalar_lea.vmem [#allocation9], %s301
        // Predicated region
        $region49: #{tpu_custom_call.1} parent=35 // pred_check
          %p303 = pneg %p138
        $region50: #{tpu_custom_call.1} parent=35 // pred_check_branch
          %305 = sbr.rel (%p303) target = $region52
        $region51: #{tpu_custom_call.1} parent=35 // pred_region
          %306 = dma.done %s299, 2048
        $region52: #{tpu_custom_call.1} parent=35 // pred_fallthru
          _
        %s307 = sand.u32 %s47, 1
        %s308 = scalar_lea.sflag [#allocation4], %s307
        %s309 = sand.u32 %s47, 1
        %s310 = smul.addr %s309, 8
        %s311 = scalar_lea.vmem [#allocation3], %s310
        %p312 = pneg %p60
        %p313 = pneg %p57
        %s314 = sand.u32 %s27, 1
        %s315 = scalar_lea.sflag [#allocation7], %s314
        %s316 = sand.u32 %s73, 1
        %s317 = smul.addr %s316, 128
        %s318 = scalar_lea.vmem [#allocation6], %s317
        %p319 = pneg %p86
        %p320 = pneg %p83
        %s321 = sand.u32 %s27, 1
        %s322 = scalar_lea.sflag [#allocation7], %s321
        %s323 = sand.u32 %s99, 1
        %s324 = smul.addr %s323, 128
        %s325 = scalar_lea.vmem [#allocation8], %s324
        %p326 = pneg %p112
        %p327 = pneg %p109
        %s328 = sand.u32 %s125, 1
        %s329 = scalar_lea.sflag [#allocation10], %s328
        %s330 = sand.u32 %s125, 1
        %s331 = smul.addr %s330, 128
        %s332 = scalar_lea.vmem [#allocation9], %s331
        %p333 = pneg %p138
        %p334 = pneg %p135
        %p335 = pneg %p164
        %p336 = pneg %p161
        %s337 = sand.u32 %s151, 1
        %s338 = scalar_lea.sflag [#allocation5], %s337
        %s339 = sand.u32 %s151, 1
        %s340 = smul.addr %s339, 8
        %s341 = scalar_lea.vmem [#allocation11], %s340
        %s342 = smul.u32 16, %s32
        %s343 = smul.u32 16, %s32
        %s344 = smul.u32 16, %s32
        %v345 = vld [vmem:[%s275] sm:$0xff]
        %v346 = vld [vmem:[%s284] sm:$0xff]
        %v347 = vld [vmem:[%s284 + $0x8] sm:$0xff]
        %v348 = vld [vmem:[%s284 + $0x10] sm:$0xff]
        %v349 = vld [vmem:[%s284 + $0x18] sm:$0xff]
        %v350 = vld [vmem:[%s284 + $0x20] sm:$0xff]
        %v351 = vld [vmem:[%s284 + $0x28] sm:$0xff]
        %v352 = vld [vmem:[%s284 + $0x30] sm:$0xff]
        %v353 = vld [vmem:[%s284 + $0x38] sm:$0xff]
        %v354 = vld [vmem:[%s284 + $0x40] sm:$0xff]
        %v355 = vld [vmem:[%s284 + $0x48] sm:$0xff]
        %v356 = vld [vmem:[%s284 + $0x50] sm:$0xff]
        %v357 = vld [vmem:[%s284 + $0x58] sm:$0xff]
        %v358 = vld [vmem:[%s284 + $0x60] sm:$0xff]
        %v359 = vld [vmem:[%s284 + $0x68] sm:$0xff]
        %v360 = vld [vmem:[%s284 + $0x70] sm:$0xff]
        %v361 = vld [vmem:[%s284 + $0x78] sm:$0xff]
        %362 = vmatprep.subr.mxu0 0.0
        %363 = vmatpush1.xpose.msra.mxu0 %v346
        %364 = vmatprep.subr.mxu0 0.0
        %365 = vmatpush1.xpose.msra.mxu0 %v347
        %366 = vmatprep.subr.mxu0 0.0
        %367 = vmatpush1.xpose.msra.mxu0 %v348
        %368 = vmatprep.subr.mxu0 0.0
        %369 = vmatpush1.xpose.msra.mxu0 %v349
        %370 = vmatprep.subr.mxu0 0.0
        %371 = vmatpush1.xpose.msra.mxu0 %v350
        %372 = vmatprep.subr.mxu0 0.0
        %373 = vmatpush1.xpose.msra.mxu0 %v351
        %374 = vmatprep.subr.mxu0 0.0
        %375 = vmatpush1.xpose.msra.mxu0 %v352
        %376 = vmatprep.subr.mxu0 0.0
        %377 = vmatpush1.xpose.msra.mxu0 %v353
        %378 = vmatprep.subr.mxu0 0.0
        %379 = vmatpush1.xpose.msra.mxu0 %v354
        %380 = vmatprep.subr.mxu0 0.0
        %381 = vmatpush1.xpose.msra.mxu0 %v355
        %382 = vmatprep.subr.mxu0 0.0
        %383 = vmatpush1.xpose.msra.mxu0 %v356
        %384 = vmatprep.subr.mxu0 0.0
        %385 = vmatpush1.xpose.msra.mxu0 %v357
        %386 = vmatprep.subr.mxu0 0.0
        %387 = vmatpush1.xpose.msra.mxu0 %v358
        %388 = vmatprep.subr.mxu0 0.0
        %389 = vmatpush1.xpose.msra.mxu0 %v359
        %390 = vmatprep.subr.mxu0 0.0
        %391 = vmatpush1.xpose.msra.mxu0 %v360
        %392 = vmatprep.subr.mxu0 0.0
        %393 = vmatpush1.xpose.msra.mxu0 %v361
        %394 = vmatprep.subr.mxu0 0.0
        %395 = vmatpush1.xpose.msra.mxu0 0.0
        %396 = vmatprep.subr.mxu0 0.0
        %397 = vmatpush1.xpose.msra.mxu0 0.0
        %398 = vmatprep.subr.mxu0 0.0
        %399 = vmatpush1.xpose.msra.mxu0 0.0
        %400 = vmatprep.subr.mxu0 0.0
        %401 = vmatpush1.xpose.msra.mxu0 0.0
        %402 = vmatprep.subr.mxu0 0.0
        %403 = vmatpush1.xpose.msra.mxu0 0.0
        %404 = vmatprep.subr.mxu0 0.0
        %405 = vmatpush1.xpose.msra.mxu0 0.0
        %406 = vmatprep.subr.mxu0 0.0
        %407 = vmatpush1.xpose.msra.mxu0 0.0
        %408 = vmatprep.subr.mxu0 0.0
        %409 = vmatpush1.xpose.msra.mxu0 0.0
        %410 = vmatprep.subr.mxu0 0.0
        %411 = vmatpush1.xpose.msra.mxu0 0.0
        %412 = vmatprep.subr.mxu0 0.0
        %413 = vmatpush1.xpose.msra.mxu0 0.0
        %414 = vmatprep.subr.mxu0 0.0
        %415 = vmatpush1.xpose.msra.mxu0 0.0
        %416 = vmatprep.subr.mxu0 0.0
        %417 = vmatpush1.xpose.msra.mxu0 0.0
        %418 = vmatprep.subr.mxu0 0.0
        %419 = vmatpush1.xpose.msra.mxu0 0.0
        %420 = vmatprep.subr.mxu0 0.0
        %421 = vmatpush1.xpose.msra.mxu0 0.0
        %422 = vmatprep.subr.mxu0 0.0
        %423 = vmatpush1.xpose.msra.mxu0 0.0
        %424 = vmatprep.subr.mxu0 0.0
        %425 = vmatpush1.xpose.msra.mxu0 0.0
        %426 = vmatprep.mubr.f32.mxu0 0.0
        %427 = vmatmul.mubr.f32.gmra.mrb[0].mxu0 %v345
        %v428 = vpop.f32.mrb[0].mxu0
        %v429 = vadd.f32 0.0, %v428
        %v430 = vpop.f32.mrb[0].mxu0
        %431 = vdwg.mxu0
        %v432 = vld [vmem:[%s293] sm:$0xff]
        %v433 = vld [vmem:[%s293 + $0x8] sm:$0xff]
        %v434 = vld [vmem:[%s293 + $0x10] sm:$0xff]
        %v435 = vld [vmem:[%s293 + $0x18] sm:$0xff]
        %v436 = vld [vmem:[%s293 + $0x20] sm:$0xff]
        %v437 = vld [vmem:[%s293 + $0x28] sm:$0xff]
        %v438 = vld [vmem:[%s293 + $0x30] sm:$0xff]
        %v439 = vld [vmem:[%s293 + $0x38] sm:$0xff]
        %v440 = vld [vmem:[%s293 + $0x40] sm:$0xff]
        %v441 = vld [vmem:[%s293 + $0x48] sm:$0xff]
        %v442 = vld [vmem:[%s293 + $0x50] sm:$0xff]
        %v443 = vld [vmem:[%s293 + $0x58] sm:$0xff]
        %v444 = vld [vmem:[%s293 + $0x60] sm:$0xff]
        %v445 = vld [vmem:[%s293 + $0x68] sm:$0xff]
        %v446 = vld [vmem:[%s293 + $0x70] sm:$0xff]
        %v447 = vld [vmem:[%s293 + $0x78] sm:$0xff]
        %448 = vmatprep.subr.mxu0 0.0
        %449 = vmatpush1.xpose.msra.mxu0 %v432
        %450 = vmatprep.subr.mxu0 0.0
        %451 = vmatpush1.xpose.msra.mxu0 %v433
        %452 = vmatprep.subr.mxu0 0.0
        %453 = vmatpush1.xpose.msra.mxu0 %v434
        %454 = vmatprep.subr.mxu0 0.0
        %455 = vmatpush1.xpose.msra.mxu0 %v435
        %456 = vmatprep.subr.mxu0 0.0
        %457 = vmatpush1.xpose.msra.mxu0 %v436
        %458 = vmatprep.subr.mxu0 0.0
        %459 = vmatpush1.xpose.msra.mxu0 %v437
        %460 = vmatprep.subr.mxu0 0.0
        %461 = vmatpush1.xpose.msra.mxu0 %v438
        %462 = vmatprep.subr.mxu0 0.0
        %463 = vmatpush1.xpose.msra.mxu0 %v439
        %464 = vmatprep.subr.mxu0 0.0
        %465 = vmatpush1.xpose.msra.mxu0 %v440
        %466 = vmatprep.subr.mxu0 0.0
        %467 = vmatpush1.xpose.msra.mxu0 %v441
        %468 = vmatprep.subr.mxu0 0.0
        %469 = vmatpush1.xpose.msra.mxu0 %v442
        %470 = vmatprep.subr.mxu0 0.0
        %471 = vmatpush1.xpose.msra.mxu0 %v443
        %472 = vmatprep.subr.mxu0 0.0
        %473 = vmatpush1.xpose.msra.mxu0 %v444
        %474 = vmatprep.subr.mxu0 0.0
        %475 = vmatpush1.xpose.msra.mxu0 %v445
        %476 = vmatprep.subr.mxu0 0.0
        %477 = vmatpush1.xpose.msra.mxu0 %v446
        %478 = vmatprep.subr.mxu0 0.0
        %479 = vmatpush1.xpose.msra.mxu0 %v447
        %480 = vmatprep.subr.mxu0 0.0
        %481 = vmatpush1.xpose.msra.mxu0 0.0
        %482 = vmatprep.subr.mxu0 0.0
        %483 = vmatpush1.xpose.msra.mxu0 0.0
        %484 = vmatprep.subr.mxu0 0.0
        %485 = vmatpush1.xpose.msra.mxu0 0.0
        %486 = vmatprep.subr.mxu0 0.0
        %487 = vmatpush1.xpose.msra.mxu0 0.0
        %488 = vmatprep.subr.mxu0 0.0
        %489 = vmatpush1.xpose.msra.mxu0 0.0
        %490 = vmatprep.subr.mxu0 0.0
        %491 = vmatpush1.xpose.msra.mxu0 0.0
        %492 = vmatprep.subr.mxu0 0.0
        %493 = vmatpush1.xpose.msra.mxu0 0.0
        %494 = vmatprep.subr.mxu0 0.0
        %495 = vmatpush1.xpose.msra.mxu0 0.0
        %496 = vmatprep.subr.mxu0 0.0
        %497 = vmatpush1.xpose.msra.mxu0 0.0
        %498 = vmatprep.subr.mxu0 0.0
        %499 = vmatpush1.xpose.msra.mxu0 0.0
        %500 = vmatprep.subr.mxu0 0.0
        %501 = vmatpush1.xpose.msra.mxu0 0.0
        %502 = vmatprep.subr.mxu0 0.0
        %503 = vmatpush1.xpose.msra.mxu0 0.0
        %504 = vmatprep.subr.mxu0 0.0
        %505 = vmatpush1.xpose.msra.mxu0 0.0
        %506 = vmatprep.subr.mxu0 0.0
        %507 = vmatpush1.xpose.msra.mxu0 0.0
        %508 = vmatprep.subr.mxu0 0.0
        %509 = vmatpush1.xpose.msra.mxu0 0.0
        %510 = vmatprep.subr.mxu0 0.0
        %511 = vmatpush1.xpose.msra.mxu0 0.0
        %512 = vmatprep.mubr.f32.mxu0 0.0
        %513 = vmatmul.mubr.f32.gmra.mrb[0].mxu0 %v345
        %v514 = vpop.f32.mrb[0].mxu0
        %v515 = vadd.f32 0.0, %v514
        %v516 = vpop.f32.mrb[0].mxu0
        %517 = vdwg.mxu0
        %v518 = vxor.u32 %v429, 2147483648
        %v519 = vmul.f32 %v518, 1.442695
        %v520 = vpow.pop %v519
        %v521 = vadd.f32 %v520, 1.0
        %v522 = vrcp.pop %v521
        %v523 = vmul.f32 1.0, %v522
        %v524 = vmul.f32 %v429, %v523
        %v525 = vmul.f32 %v524, %v515
        %v526 = vld [vmem:[%s302] sm:$0xff]
        %v527 = vld [vmem:[%s302 + $0x8] sm:$0xff]
        %v528 = vld [vmem:[%s302 + $0x10] sm:$0xff]
        %v529 = vld [vmem:[%s302 + $0x18] sm:$0xff]
        %v530 = vld [vmem:[%s302 + $0x20] sm:$0xff]
        %v531 = vld [vmem:[%s302 + $0x28] sm:$0xff]
        %v532 = vld [vmem:[%s302 + $0x30] sm:$0xff]
        %v533 = vld [vmem:[%s302 + $0x38] sm:$0xff]
        %v534 = vld [vmem:[%s302 + $0x40] sm:$0xff]
        %v535 = vld [vmem:[%s302 + $0x48] sm:$0xff]
        %v536 = vld [vmem:[%s302 + $0x50] sm:$0xff]
        %v537 = vld [vmem:[%s302 + $0x58] sm:$0xff]
        %v538 = vld [vmem:[%s302 + $0x60] sm:$0xff]
        %v539 = vld [vmem:[%s302 + $0x68] sm:$0xff]
        %v540 = vld [vmem:[%s302 + $0x70] sm:$0xff]
        %v541 = vld [vmem:[%s302 + $0x78] sm:$0xff]
        %542 = vmatprep.subr.mxu0 0.0
        %543 = vmatpush1.msra.mxu0 %v526
        %544 = vmatprep.subr.mxu0 0.0
        %545 = vmatpush1.msra.mxu0 %v527
        %546 = vmatprep.subr.mxu0 0.0
        %547 = vmatpush1.msra.mxu0 %v528
        %548 = vmatprep.subr.mxu0 0.0
        %549 = vmatpush1.msra.mxu0 %v529
        %550 = vmatprep.subr.mxu0 0.0
        %551 = vmatpush1.msra.mxu0 %v530
        %552 = vmatprep.subr.mxu0 0.0
        %553 = vmatpush1.msra.mxu0 %v531
        %554 = vmatprep.subr.mxu0 0.0
        %555 = vmatpush1.msra.mxu0 %v532
        %556 = vmatprep.subr.mxu0 0.0
        %557 = vmatpush1.msra.mxu0 %v533
        %558 = vmatprep.subr.mxu0 0.0
        %559 = vmatpush1.msra.mxu0 %v534
        %560 = vmatprep.subr.mxu0 0.0
        %561 = vmatpush1.msra.mxu0 %v535
        %562 = vmatprep.subr.mxu0 0.0
        %563 = vmatpush1.msra.mxu0 %v536
        %564 = vmatprep.subr.mxu0 0.0
        %565 = vmatpush1.msra.mxu0 %v537
        %566 = vmatprep.subr.mxu0 0.0
        %567 = vmatpush1.msra.mxu0 %v538
        %568 = vmatprep.subr.mxu0 0.0
        %569 = vmatpush1.msra.mxu0 %v539
        %570 = vmatprep.subr.mxu0 0.0
        %571 = vmatpush1.msra.mxu0 %v540
        %572 = vmatprep.subr.mxu0 0.0
        %573 = vmatpush1.msra.mxu0 %v541
        %574 = vmatprep.subr.mxu0 0.0
        %575 = vmatpush1.msra.mxu0 0.0
        %576 = vmatprep.subr.mxu0 0.0
        %577 = vmatpush1.msra.mxu0 0.0
        %578 = vmatprep.subr.mxu0 0.0
        %579 = vmatpush1.msra.mxu0 0.0
        %580 = vmatprep.subr.mxu0 0.0
        %581 = vmatpush1.msra.mxu0 0.0
        %582 = vmatprep.subr.mxu0 0.0
        %583 = vmatpush1.msra.mxu0 0.0
        %584 = vmatprep.subr.mxu0 0.0
        %585 = vmatpush1.msra.mxu0 0.0
        %586 = vmatprep.subr.mxu0 0.0
        %587 = vmatpush1.msra.mxu0 0.0
        %588 = vmatprep.subr.mxu0 0.0
        %589 = vmatpush1.msra.mxu0 0.0
        %590 = vmatprep.subr.mxu0 0.0
        %591 = vmatpush1.msra.mxu0 0.0
        %592 = vmatprep.subr.mxu0 0.0
        %593 = vmatpush1.msra.mxu0 0.0
        %594 = vmatprep.subr.mxu0 0.0
        %595 = vmatpush1.msra.mxu0 0.0
        %596 = vmatprep.subr.mxu0 0.0
        %597 = vmatpush1.msra.mxu0 0.0
        %598 = vmatprep.subr.mxu0 0.0
        %599 = vmatpush1.msra.mxu0 0.0
        %600 = vmatprep.subr.mxu0 0.0
        %601 = vmatpush1.msra.mxu0 0.0
        %602 = vmatprep.subr.mxu0 0.0
        %603 = vmatpush1.msra.mxu0 0.0
        %604 = vmatprep.subr.mxu0 0.0
        %605 = vmatpush1.msra.mxu0 0.0
        %606 = vmatprep.mubr.f32.mxu0 0.0
        %607 = vmatmul.mubr.f32.gmra.mrb[0].mxu0 %v525
        %v608 = vpop.f32.mrb[0].mxu0
        %v609 = vadd.f32 0.0, %v608
        %v610 = vpop.f32.mrb[0].mxu0
        %611 = vdwg.mxu0
        %p612 = scmp.eq.s32.totalorder %s32, 0
        // Predicated region
        $region53: #{tpu_custom_call.1} parent=35 // pred_check
          %p613 = pneg %p612
        $region54: #{tpu_custom_call.1} parent=35 // pred_check_branch
          %615 = sbr.rel (%p613) target = $region56
        $region55: #{tpu_custom_call.1} parent=35 // pred_region
          %616 = vst [vmem:[#allocation2] sm:$0xff] %v609
        $region56: #{tpu_custom_call.1} parent=35 // pred_fallthru
          _
        %p617 = scmp.ne.s32.totalorder %s32, 0
        // Predicated region
        $region57: #{tpu_custom_call.1} parent=35 // pred_check
          %p618 = pneg %p617
        $region58: #{tpu_custom_call.1} parent=35 // pred_check_branch
          %620 = sbr.rel (%p618) target = $region60
        $region59: #{tpu_custom_call.1} parent=35 // pred_region
          %v621 = vld [vmem:[#allocation2] sm:$0xff]
          %v622 = vadd.f32 %v621, %v609
          %623 = vst [vmem:[#allocation2] sm:$0xff] %v622
        $region60: #{tpu_custom_call.1} parent=35 // pred_fallthru
          _
        %p624 = scmp.eq.s32.totalorder %s32, 2
        // Predicated region
        $region61: #{tpu_custom_call.1} parent=35 // pred_check
          %p625 = pneg %p624
        $region62: #{tpu_custom_call.1} parent=35 // pred_check_branch
          %627 = sbr.rel (%p625) target = $region64
        $region63: #{tpu_custom_call.1} parent=35 // pred_region
          %v628 = vld [vmem:[#allocation2] sm:$0xff]
          %629 = vst [vmem:[%s341] sm:$0xff] %v628
        $region64: #{tpu_custom_call.1} parent=35 // pred_fallthru
          _
        %s630 = sand.u32 %s151, 1
        %s631 = scalar_lea.sflag [#allocation5], %s630
        %s632 = sand.u32 %s151, 1
        %s633 = smul.addr %s632, 8
        %s634 = scalar_lea.vmem [#allocation11], %s633
        // Predicated region
        $region65: #{tpu_custom_call.1} parent=35 // pred_check
          %p635 = pneg %p161
        $region66: #{tpu_custom_call.1} parent=35 // pred_check_branch
          %637 = sbr.rel (%p635) target = $region68
        $region67: #{tpu_custom_call.1} parent=35 // pred_region
          %s639 = ssub.s32 128, 128
          %640 = vsyncadd %s631, %s639
          %s641 = smul.addr %s31, 128
          %s642 = scalar_lea.hbm %s4, %s641
          %s644 = sshll.u32 %s634, 4
          %s645 = int_to_ptr.vmem [resolvable:$true] %s644
          %647 = dma.vmem_to_hbm [thread:$0]  %s645, 128, %s642, %s631
        $region68: #{tpu_custom_call.1} parent=35 // pred_fallthru
          _
      $region36: #{tpu_custom_call.1} parent=5 // pred_fallthru
        _
      %p648 = scmp.le.s32.totalorder 2, %s22
      // Predicated region
      $region69: #{tpu_custom_call.1} parent=5 // pred_check
        %p649 = pneg %p648
      $region70: #{tpu_custom_call.1} parent=5 // pred_check_branch
        %651 = sbr.rel (%p649) target = $region72
      $region71: #{tpu_custom_call.1} parent=5 // pred_region
        %s652 = ssub.s32 %s22, 2
        // Predicated region
        $region73: #{tpu_custom_call.1} parent=71 // pred_check
          %p653 = pneg %p167
        $region74: #{tpu_custom_call.1} parent=71 // pred_check_branch
          %655 = sbr.rel (%p653) target = $region76
        $region75: #{tpu_custom_call.1} parent=71 // pred_region
          %s656 = sand.u32 %s152, 1
          %s657 = scalar_lea.sflag [#allocation5], %s656
          %s658 = sand.u32 %s152, 1
          %s659 = smul.addr %s658, 8
          %s660 = scalar_lea.vmem [#allocation11], %s659
          %661 = dma.done %s657, 128
        $region76: #{tpu_custom_call.1} parent=71 // pred_fallthru
          _
      $region72: #{tpu_custom_call.1} parent=5 // pred_fallthru
        _
    $region6: #{tpu_custom_call.1} parent=1 // loop_footer
      %s26 = sadd.s32 1, %s22
    $region7: #{tpu_custom_call.1} parent=1 // loop_footer_branch
      %21 = sbr.rel target = $region3
    $region8: #{tpu_custom_call.1} parent=1 // loop_exit
      _
    %662 = vsyncpa [#allocation4], 1
    %s663 = scalar_lea.sflag [#allocation4], 1
    %664 = vsyncpa %s663, 1
    %665 = vsyncpa [#allocation7], 1
    %s666 = scalar_lea.sflag [#allocation7], 1
    %667 = vsyncpa %s666, 1
    %668 = vsyncpa [#allocation10], 1
    %s669 = scalar_lea.sflag [#allocation10], 1
    %670 = vsyncpa %s669, 1
    %671 = vsyncpa [#allocation5], 1
    %s672 = scalar_lea.sflag [#allocation5], 1
    %673 = vsyncpa %s672, 1

</llo_original>
